<compile_context>
chip_gen: v5e
topology: v5e:2x2
jax: 0.10.0
libtpu: 0.0.40
codegen_flags: <defaults>
</compile_context>

<pallas_src>
import math
import numpy as np

import jax
import jax.numpy as jnp
from jax.experimental import pallas as pl
from jax.experimental.pallas import tpu as pltpu


# ---------------------------------------------------------------------------
# small helpers
# ---------------------------------------------------------------------------
def _round_up(x, k):
    return (x + k - 1) // k * k


def _tpu_vmem_capacity():
    try:
        info = pltpu.get_tpu_info()
        cap = getattr(info, "vmem_capacity_bytes", None)
        if cap:
            return int(cap)
    except Exception:
        pass
    return 64 << 20        # conservative fallback (assume v7x-sized VMEM)


def _hw_budgets():
    """(per-batch-tile byte budget, vmem_limit_bytes) per TPU generation."""
    cap = _tpu_vmem_capacity()
    if cap >= (100 << 20):            # v5e / v6e: 128 MiB physical VMEM
        return 4 << 20, 64 << 20
    return 2 << 20, 48 << 20          # v7x: 64 MiB physical VMEM per TC


def _pick_batch_tile(row_bytes, b_flat, budget_bytes, cap_rows=2048):
    """Batch (sublane) tile: multiple of 16, sized so one tile of `row_bytes`
    per row stays inside `budget_bytes`; kept small enough that at least two
    grid steps exist for larger batches (v7x has 2 TensorCores)."""
    tb = max(16, min(cap_rows, budget_bytes // max(row_bytes, 1)))
    tb = (tb // 16) * 16
    tb = min(tb, _round_up(max(b_flat, 1), 16))
    if b_flat >= 32:
        tb = min(tb, max(16, _round_up((b_flat + 1) // 2, 16)))
    return max(16, tb)


# One-time calibration of pltpu.roll's rotation direction (cheap, cached).
_ROLL_LIKE_NUMPY = None


def _roll_is_numpy_convention():
    """True iff pltpu.roll(x, s, axis) == np.roll(x, s, axis), i.e. out[i] = x[i-s]."""
    global _ROLL_LIKE_NUMPY
    if _ROLL_LIKE_NUMPY is None:
        def probe(x_ref, o_ref):
            o_ref[...] = pltpu.roll(x_ref[...], 1, axis=1)

        x = jnp.arange(8 * 128, dtype=jnp.float32).reshape(8, 128)
        y = pl.pallas_call(
            probe, out_shape=jax.ShapeDtypeStruct((8, 128), jnp.float32))(x)
        _ROLL_LIKE_NUMPY = bool(np.asarray(y)[0, 1] == 0.0)
    return _ROLL_LIKE_NUMPY


# One-time probe: does a (1, n) boolean mask broadcast inside jnp.where lower?
_SELECT_BCAST_OK = None


def _select_broadcast_ok():
    global _SELECT_BCAST_OK
    if _SELECT_BCAST_OK is None:
        def probe(x_ref, o_ref):
            pos = jax.lax.broadcasted_iota(jnp.int32, (1, 128), 1)
            first = (pos & 1) == 0
            o_ref[...] = jnp.where(first, x_ref[...], -x_ref[...])

        try:
            x = jnp.ones((8, 128), jnp.float32)
            y = pl.pallas_call(
                probe, out_shape=jax.ShapeDtypeStruct((8, 128), jnp.float32))(x)
            y = np.asarray(jax.block_until_ready(y))
            _SELECT_BCAST_OK = bool(y[0, 0] == 1.0 and y[0, 1] == -1.0)
        except Exception:
            _SELECT_BCAST_OK = False
    return _SELECT_BCAST_OK


# ---------------------------------------------------------------------------
# Pallas kernels
# ---------------------------------------------------------------------------
def _make_butterfly_kernel(m, n, roll_like_numpy, merged):
    """Fused m-stage butterfly on a (TB, n) tile; features on lanes.

    merged=True : per stage x = cs*x + cp*select(first_half, up, dn)
                  -> 2 XLU rolls + 4 VALU ops per stage.
    merged=False: per stage x = cs*x + cu*up + cd*dn (pre-masked cu/cd)
                  -> 2 XLU rolls + 5 VALU ops per stage (fallback).
    """
    rows = 2 if merged else 3

    def kernel(x_ref, coef_ref, o_ref):
        # x_ref:    (TB, n)          batch tile (batch on sublanes, features on lanes)
        # coef_ref: (1, rows*m, n)   per-stage coefficient planes for one stack slice
        # o_ref:    (TB, n)          output tile for this (batch tile, stack) pair
        x = x_ref[...]
        if merged:
            pos = jax.lax.broadcasted_iota(jnp.int32, (1, n), 1)
        for k in range(m):                       # stage k applies blocks of size 2 << k
            half = 1 << k
            base = rows * k
            cs = coef_ref[0, base + 0: base + 1, :]        # (1, n) coeff of x[:, p]
            up_shift = (n - half) if roll_like_numpy else half
            dn_shift = half if roll_like_numpy else (n - half)
            up = pltpu.roll(x, up_shift, axis=1)           # x[:, (p + half) % n]
            dn = pltpu.roll(x, dn_shift, axis=1)           # x[:, (p - half) % n]
            if merged:
                cp = coef_ref[0, base + 1: base + 2, :]    # (1, n) partner coeff
                first = (pos & half) == 0                  # (1, n) first-half mask
                x = cs * x + cp * jnp.where(first, up, dn)
            else:
                cu = coef_ref[0, base + 1: base + 2, :]    # coeff of x[:, p + half]
                cd = coef_ref[0, base + 2: base + 3, :]    # coeff of x[:, p - half]
                # wrap-around lanes of the rolls are killed by zero-masked coeffs
                x = cs * x + cu * up + cd * dn
        o_ref[...] = x

    return kernel


def _dense_kernel(x_ref, wt_ref, o_ref):
    # (TB, n_pad)[bf16] @ (n_pad, tn)[bf16] on the MXU, f32 accumulate.
    o_ref[...] = jnp.dot(x_ref[...], wt_ref[...], preferred_element_type=jnp.float32)


# ---------------------------------------------------------------------------
# Parameter expansion / folding (plain JAX, batch independent, built once)
# ---------------------------------------------------------------------------
def _expand_coefs(ABCD_list, n, m, stack, merged):
    """Expand the factor params into per-position coefficient planes.

    merged=True : (stack, 2m, n);  row 2k   = self coeff (A first half / D second)
                                   row 2k+1 = partner coeff (B first half / C second)
    merged=False: (stack, 3m, n);  rows 3k / 3k+1 / 3k+2 = self / +half (masked) /
                                   -half (masked) coefficients.
    """
    pos = jnp.arange(n)
    planes = []
    for k in range(m):                       # application order: sizes 2, 4, ..., n
        sz = 2 << k
        half = sz >> 1
        ABCD = ABCD_list[m - 1 - k]          # (stack, 2, 2, half)
        reps = n // half
        A = jnp.tile(ABCD[:, 0, 0, :], (1, reps))     # value at p is A[p % half]
        B = jnp.tile(ABCD[:, 0, 1, :], (1, reps))
        C = jnp.tile(ABCD[:, 1, 0, :], (1, reps))
        D = jnp.tile(ABCD[:, 1, 1, :], (1, reps))
        first = ((pos & half) == 0)[None, :]          # (1, n)
        planes.append(jnp.where(first, A, D))         # self coefficient
        if merged:
            planes.append(jnp.where(first, B, C))     # partner coefficient
        else:
            planes.append(jnp.where(first, B, 0.0))   # partner p + half
            planes.append(jnp.where(first, 0.0, C))   # partner p - half
    return jnp.stack(planes, axis=1).astype(jnp.float32)


def _apply_factors_ref(ABCD_list, x2d, n, m, stack):
    """Apply the product of factors exactly like the PyTorch module.
    x2d: (B, n) -> (stack, B, n)."""
    out = jnp.broadcast_to(x2d[None], (stack,) + x2d.shape)
    for i_f in reversed(range(m)):
        half = (n >> i_f) // 2
        ABCD = ABCD_list[i_f]                          # (stack, 2, 2, half)
        v = out.reshape(stack, -1, 2, half)
        out = jnp.einsum('sikj,sbkj->sbij', ABCD, v).reshape(out.shape)
    return out


def _dense_matrix(ABCD_list, n, m, stack):
    """Fold all m factors into WT of shape (n, stack*n) s.t. y = x @ WT."""
    applied = _apply_factors_ref(ABCD_list, jnp.eye(n, dtype=jnp.float32), n, m, stack)
    # applied[s, q, p] = M_s[p, q]  (column q of the stack-s linear map)
    return jnp.transpose(applied, (1, 0, 2)).reshape(n, stack * n)


# ---------------------------------------------------------------------------
# Module wrapper (real path, decreasing_size=True)
# ---------------------------------------------------------------------------
class Block2x2DiagProductRectangular:
    def __init__(self, in_size, out_size, key, dense_threshold=512,
                 dense_dtype=jnp.bfloat16):
        self.in_size = in_size
        self.m = int(math.ceil(math.log2(in_size)))
        self.n = 1 << self.m                               # in_size_extended
        self.out_size = out_size
        self.stack = int(math.ceil(out_size / self.n))
        self.dense_dtype = dense_dtype
        # Dense (folded single-matmul) path when n is small or would be
        # lane-sparse (< 128 lanes -> masked partial stores / partial rolls).
        self.use_dense = (self.n <= dense_threshold) or (self.n < 128)

        sizes = [self.n >> i for i in range(self.m)]       # decreasing sizes
        keys = jax.random.split(key, max(self.m, 1))
        scaling = 1.0 / math.sqrt(2)
        # ABCD[i] has shape (stack, 2, 2, sizes[i] // 2), deterministic init
        self.ABCD = [
            scaling * jax.random.normal(
                keys[i], (self.stack, 2, 2, sizes[i] // 2), jnp.float32)
            for i in range(self.m)
        ]

        self._wt = None        # cached folded bf16 weight (dense path)
        self._coef = None      # cached coefficient planes (butterfly path)
        self._fwd = None       # cached jitted forward

    # -- cached parameter expansion ----------------------------------------
    def _get_wt(self):
        if self._wt is None:
            n_pad = _round_up(self.n, 128)
            oc_pad = _round_up(self.stack * self.n, 128)
            wt = _dense_matrix(self.ABCD, self.n, self.m, self.stack)
            wt = jnp.pad(wt, ((0, n_pad - self.n), (0, oc_pad - self.stack * self.n)))
            self._wt = wt.astype(self.dense_dtype)
        return self._wt

    def _get_coef(self):
        if self._coef is None:
            self._coef = _expand_coefs(self.ABCD, self.n, self.m, self.stack,
                                       merged=_select_broadcast_ok())
        return self._coef

    # -- jitted forward builders --------------------------------------------
    def _build_dense_fn(self):
        n, stack = self.n, self.stack
        in_size, out_size = self.in_size, self.out_size
        n_pad = _round_up(n, 128)
        oc_pad = _round_up(stack * n, 128)
        tn = next(t for t in (512, 256, 128) if oc_pad % t == 0)  # column tile
        nc = oc_pad // tn
        tile_budget, vmem_limit = _hw_budgets()
        dense_dtype = self.dense_dtype

        def fwd(x, wt_padded):
            batch_shape = x.shape[:-1]
            b_flat = int(np.prod(batch_shape)) if batch_shape else 1
            xp = x.astype(jnp.float32).reshape(b_flat, in_size)
            # zero-pad features straight to the lane-aligned MXU width; padded
            # columns hit zero rows of wt_padded.
            xp = jnp.pad(xp, ((0, 0), (0, n_pad - in_size)))
            row_bytes = 2 * n_pad + 4 * tn            # bf16 in row + f32 out row
            tb = _pick_batch_tile(row_bytes, b_flat, tile_budget)
            b_pad = _round_up(b_flat, tb)
            nb = b_pad // tb
            xp = jnp.pad(xp, ((0, b_pad - b_flat), (0, 0))).astype(dense_dtype)
            out = pl.pallas_call(
                _dense_kernel,
                out_shape=jax.ShapeDtypeStruct((b_pad, oc_pad), jnp.float32),
                grid=(nb, nc),
                in_specs=[
                    pl.BlockSpec((tb, n_pad), lambda j, c: (j, 0)),   # x reused over c
                    pl.BlockSpec((n_pad, tn), lambda j, c: (0, c)),   # wt column tile
                ],
                out_specs=pl.BlockSpec((tb, tn), lambda j, c: (j, c)),
                compiler_params=pltpu.CompilerParams(
                    dimension_semantics=("parallel", "parallel"),
                    vmem_limit_bytes=vmem_limit),
            )(xp, wt_padded)
            y = out[:b_flat, :out_size]
            return y.reshape(batch_shape + (out_size,))

        return jax.jit(fwd)

    def _build_butterfly_fn(self):
        n, m, stack = self.n, self.m, self.stack
        in_size, out_size = self.in_size, self.out_size
        tile_budget, vmem_limit = _hw_budgets()
        merged = _select_broadcast_ok()
        rows = 2 if merged else 3
        kernel = _make_butterfly_kernel(m, n, _roll_is_numpy_convention(), merged)

        def fwd(x, coef):
            batch_shape = x.shape[:-1]
            b_flat = int(np.prod(batch_shape)) if batch_shape else 1
            xp = x.astype(jnp.float32).reshape(b_flat, in_size)
            xp = jnp.pad(xp, ((0, 0), (0, n - in_size)))   # zero-pad features to 2^m
            row_bytes = 8 * n                              # f32 in + f32 out per row
            tb = _pick_batch_tile(row_bytes, b_flat, tile_budget)
            b_pad = _round_up(b_flat, tb)
            nb = b_pad // tb
            xp = jnp.pad(xp, ((0, b_pad - b_flat), (0, 0)))
            out = pl.pallas_call(
                kernel,
                out_shape=jax.ShapeDtypeStruct((b_pad, stack * n), jnp.float32),
                grid=(nb, stack),                          # batch tiles x stack
                in_specs=[
                    pl.BlockSpec((tb, n), lambda j, s: (j, 0)),           # x reused over s
                    pl.BlockSpec((1, rows * m, n), lambda j, s: (s, 0, 0)),
                ],
                out_specs=pl.BlockSpec((tb, n), lambda j, s: (j, s)),     # stack on lanes
                compiler_params=pltpu.CompilerParams(
                    dimension_semantics=("parallel", "parallel"),
                    vmem_limit_bytes=vmem_limit),
            )(xp, coef)
            y = out[:b_flat, :out_size]
            return y.reshape(batch_shape + (out_size,))

        return jax.jit(fwd)

    # -- public API ----------------------------------------------------------
    def forward(self, x):
        if self._fwd is None:
            self._fwd = (self._build_dense_fn() if self.use_dense
                         else self._build_butterfly_fn())
        if self.use_dense:
            return self._fwd(x, self._get_wt())
        return self._fwd(x, self._get_coef())


# ---------------------------------------------------------------------------
# Pure-JAX reference replicating the PyTorch forward exactly (for validation).
# ---------------------------------------------------------------------------
def reference_forward(x, mod):
    n, m, stack = mod.n, mod.m, mod.stack
    batch_shape = x.shape[:-1]
    b = int(np.prod(batch_shape)) if batch_shape else 1
    xp = x.astype(jnp.float32).reshape(b, mod.in_size)
    if mod.in_size != n:
        xp = jnp.pad(xp, ((0, 0), (0, n - mod.in_size)))
    out = _apply_factors_ref(mod.ABCD, xp, n, m, stack)          # (stack, b, n)
    out = jnp.transpose(out, (1, 0, 2)).reshape(b, stack * n)[:, : mod.out_size]
    return out.reshape(batch_shape + (mod.out_size,))


if __name__ == "__main__":
    key = jax.random.PRNGKey(0)
    kx1, kp1, kx2, kp2, kx3, kp3 = jax.random.split(key, 6)

    # --- dense bf16 MXU path (n_ext = 16, stack = 2) ---
    mod_d = Block2x2DiagProductRectangular(12, 24, kp1)
    x1 = jax.random.normal(kx1, (2, 4, 12), jnp.float32)
    y1 = jax.block_until_ready(mod_d.forward(x1))
    y1_ref = jax.block_until_ready(reference_forward(x1, mod_d))
    assert y1.shape == (2, 4, 24), y1.shape
    # bf16 operands, f32 accumulate -> tolerance sized for bf16 rounding
    np.testing.assert_allclose(np.asarray(y1), np.asarray(y1_ref), rtol=5e-2, atol=5e-2)

    # --- fused elementwise butterfly path (n_ext = 128, stack = 1), pure f32 ---
    mod_b = Block2x2DiagProductRectangular(120, 100, kp2, dense_threshold=0)
    x2 = jax.random.normal(kx2, (2, 4, 120), jnp.float32)
    y2 = jax.block_until_ready(mod_b.forward(x2))
    y2_ref = jax.block_until_ready(reference_forward(x2, mod_b))
    assert y2.shape == (2, 4, 100), y2.shape
    np.testing.assert_allclose(np.asarray(y2), np.asarray(y2_ref), rtol=1e-4, atol=1e-5)

    # --- dense path with column tiling exercised (n_ext = 256, stack = 3, 3 column tiles) ---
    mod_t = Block2x2DiagProductRectangular(200, 700, kp3)
    x3 = jax.random.normal(kx3, (3, 5, 200), jnp.float32)
    y3 = jax.block_until_ready(mod_t.forward(x3))
    y3_ref = jax.block_until_ready(reference_forward(x3, mod_t))
    assert y3.shape == (3, 5, 700), y3.shape
    # longer K=256 bf16 contraction -> slightly looser bound
    np.testing.assert_allclose(np.asarray(y3), np.asarray(y3_ref), rtol=1e-1, atol=1e-1)

    print("KERNEL_OK")
</pallas_src>

<mosaic_0001>
module attributes {stable_mosaic.version = 11 : i64} {
  func.func @_dense_kernel(%arg0: i32, %arg1: i32, %arg2: memref<16x128xbf16, #tpu.memory_space<vmem>>, %arg3: memref<128x128xbf16, #tpu.memory_space<vmem>>, %arg4: memref<16x128xf32, #tpu.memory_space<vmem>>) attributes {dimension_semantics = [#tpu.dimension_semantics<parallel>, #tpu.dimension_semantics<parallel>], iteration_bounds = array<i64: 1, 1>, scalar_prefetch = 0 : i64, scratch_operands = 0 : i64, tpu.core_type = #tpu.core_type<tc>, window_params = [{transform_indices = @transform_0, window_bounds = array<i64: 16, 128>}, {transform_indices = @transform_1, window_bounds = array<i64: 128, 128>}, {transform_indices = @transform_2, window_bounds = array<i64: 16, 128>}]} {
    %c0 = arith.constant 0 : index
    %c0_0 = arith.constant 0 : index
    %0 = vector.load %arg2[%c0, %c0_0] : memref<16x128xbf16, #tpu.memory_space<vmem>>, vector<16x128xbf16>
    %c0_1 = arith.constant 0 : index
    %c0_2 = arith.constant 0 : index
    %1 = vector.load %arg3[%c0_1, %c0_2] : memref<128x128xbf16, #tpu.memory_space<vmem>>, vector<128x128xbf16>
    %cst = arith.constant dense<0.000000e+00> : vector<16x128xf32>
    %2 = tpu.matmul %0, %1, %cst {dimension_numbers = #tpu.dot_dimension_numbers<[1], [0], [0], [1], [0, 0, 1, 1], [], []>} : vector<16x128xbf16>, vector<128x128xbf16>, vector<16x128xf32> -> vector<16x128xf32>
    %c0_3 = arith.constant 0 : index
    %c0_4 = arith.constant 0 : index
    %3 = vector.load %arg4[%c0_3, %c0_4] : memref<16x128xf32, #tpu.memory_space<vmem>>, vector<16x128xf32>
    tpu.vector_store %arg4[%c0_3, %c0_4], %2 {strides = array<i32>} : memref<16x128xf32, #tpu.memory_space<vmem>>, vector<16x128xf32>,
    return
  }
  func.func @transform_0(%arg0: i32, %arg1: i32) -> (i32, i32) {
    %c0_i32 = arith.constant 0 : i32
    %c0_i32_0 = arith.constant 0 : i32
    return %arg0, %c0_i32 : i32, i32
  }
  func.func @transform_1(%arg0: i32, %arg1: i32) -> (i32, i32) {
    %c0_i32 = arith.constant 0 : i32
    %c0_i32_0 = arith.constant 0 : i32
    return %c0_i32, %arg1 : i32, i32
  }
  func.func @transform_2(%arg0: i32, %arg1: i32) -> (i32, i32) {
    %c0_i32 = arith.constant 0 : i32
    return %arg0, %arg1 : i32, i32
  }
}

</mosaic_0001>

<llo_original>
// kernel: fwd.1
$region0: #{fwd.1}
  #allocation0 [shape = 'u32[]', space=smem, size = 0x4, offset = 0x4, fixed_abs, tag = 'smem constant byte address 0x4 - core index']
  #allocation1 [shape = 'u32[72,128]{1,0:T(1,128)}', space=vmem, size = 0x9000, scoped, tag = 'internal scratch']
  %s0 = inlined_call_operand.vmem [shape: bf16[16,128], index: 0, kind: input, shape index: {}]
  %s1 = inlined_call_operand.hbm [shape: bf16[128,128], index: 1, kind: input, shape index: {}]
  %s2 = inlined_call_operand.vmem [shape: f32[16,128], index: 2, kind: output, shape index: {}]
  %s3 = sld [smem:[#allocation0]]
  $region22: #{fwd.1} parent=0
    _
  %s5 = ssub.s32 1, %s3
  %s6 = scalar_select 0, %s5, %s3
  $region1: #{fwd.1} parent=0
    #allocation2 [shape = 'u8[32768]{0}', space=vmem, size = 0x8000, scoped, tag = 'input window, operand 1, single buffered']
    #allocation3 [shape = 's32[1]{0}', space=sflag, size = 0x4, scoped, tag = 'scoped memory for fwd.1']
    %7 = vsyncpa [#allocation3], 0
    // Predicated region
    $region2: #{fwd.1} parent=1 // pred_check
      _
    $region3: #{fwd.1} parent=1 // pred_check_branch
      %9 = sbr.rel (0) target = $region5
    $region4: #{fwd.1} parent=1 // pred_region
      _
    $region5: #{fwd.1} parent=1 // pred_fallthru
      _
    // Predicated region
    $region6: #{fwd.1} parent=1 // pred_check
      _
    $region7: #{fwd.1} parent=1 // pred_check_branch
      %11 = sbr.rel (0) target = $region9
    $region8: #{fwd.1} parent=1 // pred_region
      %13 = vsyncadd [#allocation3], 0
      %s14 = sshll.u32 %s1, 4
      %s15 = int_to_ptr.hbm [resolvable:$true] %s14
      %s16 = sshll.u32 [#allocation2], 4
      %s17 = int_to_ptr.vmem [resolvable:$true] %s16
      %22 = dma.hbm_to_vmem [thread:$0]  %s15, 1024, %s17, [#allocation3], 64, 64, 4
    $region9: #{fwd.1} parent=1 // pred_fallthru
      _
    // Predicated region
    $region10: #{fwd.1} parent=1 // pred_check
      _
    $region11: #{fwd.1} parent=1 // pred_check_branch
      %24 = sbr.rel (0) target = $region13
    $region12: #{fwd.1} parent=1 // pred_region
      %26 = dma.done [#allocation3], 1024
    $region13: #{fwd.1} parent=1 // pred_fallthru
      _
    %v27 = vld [vmem:[%s0] sm:$0xf]
    %v28 = vld [vmem:[%s0 + $0x4] sm:$0xf]
    %v29 = vld [vmem:[#allocation2] sm:$0xf]
    %v30 = vld [vmem:[#allocation2 + $0x4] sm:$0xf]
    %v31 = vld [vmem:[#allocation2 + $0x8] sm:$0xf]
    %v32 = vld [vmem:[#allocation2 + $0xc] sm:$0xf]
    %v33 = vld [vmem:[#allocation2 + $0x10] sm:$0xf]
    %v34 = vld [vmem:[#allocation2 + $0x14] sm:$0xf]
    %v35 = vld [vmem:[#allocation2 + $0x18] sm:$0xf]
    %v36 = vld [vmem:[#allocation2 + $0x1c] sm:$0xf]
    %v37 = vld [vmem:[#allocation2 + $0x20] sm:$0xf]
    %v38 = vld [vmem:[#allocation2 + $0x24] sm:$0xf]
    %v39 = vld [vmem:[#allocation2 + $0x28] sm:$0xf]
    %v40 = vld [vmem:[#allocation2 + $0x2c] sm:$0xf]
    %v41 = vld [vmem:[#allocation2 + $0x30] sm:$0xf]
    %v42 = vld [vmem:[#allocation2 + $0x34] sm:$0xf]
    %v43 = vld [vmem:[#allocation2 + $0x38] sm:$0xf]
    %v44 = vld [vmem:[#allocation2 + $0x3c] sm:$0xf]
    %v47 = vunpack.c.l.b16 %v27
    %v48 = vunpack.c.l.b16 %v28
    %v49 = vpack.c.b16 %v48, %v47
    %v67 = vunpack.c.l.b16 %v29
    %v68 = vunpack.c.l.b16 %v30
    %v69 = vunpack.c.l.b16 %v31
    %v70 = vunpack.c.l.b16 %v32
    %v71 = vunpack.c.l.b16 %v33
    %v72 = vunpack.c.l.b16 %v34
    %v73 = vunpack.c.l.b16 %v35
    %v74 = vunpack.c.l.b16 %v36
    %v75 = vunpack.c.l.b16 %v37
    %v76 = vunpack.c.l.b16 %v38
    %v77 = vunpack.c.l.b16 %v39
    %v78 = vunpack.c.l.b16 %v40
    %v79 = vunpack.c.l.b16 %v41
    %v80 = vunpack.c.l.b16 %v42
    %v81 = vunpack.c.l.b16 %v43
    %v82 = vunpack.c.l.b16 %v44
    %v83 = vpack.c.b16 %v68, %v67
    %v84 = vpack.c.b16 %v70, %v69
    %v85 = vpack.c.b16 %v72, %v71
    %v86 = vpack.c.b16 %v74, %v73
    %v87 = vpack.c.b16 %v76, %v75
    %v88 = vpack.c.b16 %v78, %v77
    %v89 = vpack.c.b16 %v80, %v79
    %v90 = vpack.c.b16 %v82, %v81
    %99 = vmatpush.bf16.msra.mxu0 %v90
    %100 = vmatpush.bf16.msra.mxu0 %v89
    %101 = vmatpush.bf16.msra.mxu0 %v88
    %102 = vmatpush.bf16.msra.mxu0 %v87
    %103 = vmatpush.bf16.msra.mxu0 %v86
    %104 = vmatpush.bf16.msra.mxu0 %v85
    %105 = vmatpush.bf16.msra.mxu0 %v84
    %106 = vmatpush.bf16.msra.mxu0 %v83
    %107 = vmatmul.bf16.gmra.mxu0 %v49
    %v108 = vpop.f32.mrf.mxu0
    %v109 = vadd.f32 0.0, %v108
    %v110 = vpop.f32.mrf.mxu0
    %v111 = vadd.f32 0.0, %v110
    %112 = vdwg.mxu0
    %113 = vst [vmem:[%s2] sm:$0xff] %v109
    %114 = vst [vmem:[%s2 + $0x8] sm:$0xff] %v111
    // Predicated region
    $region14: #{fwd.1} parent=1 // pred_check
      _
    $region15: #{fwd.1} parent=1 // pred_check_branch
      %116 = sbr.rel (0) target = $region17
    $region16: #{fwd.1} parent=1 // pred_region
      _
    $region17: #{fwd.1} parent=1 // pred_fallthru
      _
    // Predicated region
    $region18: #{fwd.1} parent=1 // pred_check
      _
    $region19: #{fwd.1} parent=1 // pred_check_branch
      %118 = sbr.rel (0) target = $region21
    $region20: #{fwd.1} parent=1 // pred_region
      _
    $region21: #{fwd.1} parent=1 // pred_fallthru
      _
    %119 = vsyncpa [#allocation3], 1

</llo_original>
